<compile_context>
chip_gen: v7x
topology: tpu7x:2x2x1
jax: 0.10.0
libtpu: 0.0.40
codegen_flags: <defaults>
</compile_context>

<pallas_src>
import jax
import jax.numpy as jnp
from jax.experimental import pallas as pl
from jax.experimental.pallas import tpu as pltpu

_MIB = 1024 * 1024


def _round_up(x, m):
    return (x + m - 1) // m * m


def _vmem_capacity_bytes():
    """Physical VMEM per core; conservative v7x value if the query fails."""
    try:
        info = pltpu.get_tpu_info()
        cap = getattr(info, "vmem_capacity_bytes", None)
        if cap:
            return int(cap)
    except Exception:
        pass
    return 64 * _MIB


# ----------------------------------------------------------------------------
# Kernel
# ----------------------------------------------------------------------------
def _bottleneck_kernel(x_ref, w1t_ref, w2t_ref, b1_ref, b2_ref, o_ref):
    # Single load of the x tile; derive both the bf16 MXU operand and the f32
    # residual from it (no duplicate VMEM loads / reliance on CSE).
    x = x_ref[...]
    x_f32 = x.astype(jnp.float32)

    # linear1 (bn1 scale pre-folded into w1t columns) + shift + relu
    h = jnp.dot(x.astype(jnp.bfloat16), w1t_ref[...],
                preferred_element_type=jnp.float32)
    h = jnp.maximum(h + b1_ref[...], 0.0)

    # linear2 (bn2 scale pre-folded into w2t columns) + shift + residual + relu
    o = jnp.dot(h.astype(jnp.bfloat16), w2t_ref[...],
                preferred_element_type=jnp.float32)
    o = jnp.maximum(o + b2_ref[...] + x_f32, 0.0)
    o_ref[...] = o.astype(o_ref.dtype)


# ----------------------------------------------------------------------------
# Parameter preparation (done once, outside the per-call hot path)
# ----------------------------------------------------------------------------
def fold_bn(gamma, beta, running_mean, running_var, eps=1e-5):
    scale = gamma / jnp.sqrt(running_var + eps)
    shift = beta - running_mean * scale
    return scale, shift


def prepare_params(w1, w2, bn1_params, bn2_params, eps=1e-5):
    """Fold BN into the conv weights, pad channels to 128, cast weights to bf16."""
    c = w1.shape[0]
    c_pad = _round_up(c, 128)
    pad = c_pad - c

    s1, b1 = fold_bn(*bn1_params, eps=eps)
    s2, b2 = fold_bn(*bn2_params, eps=eps)

    # (x @ w.T) * s  ==  x @ (w.T * s[None, :]); epilogue is then shift + relu.
    w1t = jnp.transpose(w1) * s1[None, :]
    w2t = jnp.transpose(w2) * s2[None, :]

    w1t = jnp.pad(w1t, ((0, pad), (0, pad))).astype(jnp.bfloat16)
    w2t = jnp.pad(w2t, ((0, pad), (0, pad))).astype(jnp.bfloat16)
    b1 = jnp.pad(b1, (0, pad)).reshape(1, c_pad).astype(jnp.float32)
    b2 = jnp.pad(b2, (0, pad)).reshape(1, c_pad).astype(jnp.float32)
    return w1t, w2t, b1, b2


# ----------------------------------------------------------------------------
# Wrapper
# ----------------------------------------------------------------------------
def bottleneck_linear(x, prepared, *, max_tile_n=2048):
    """x: (N, C), f32 or bf16 (bf16 halves activation HBM traffic; the residual
    is then carried at bf16-of-input resolution). prepared = prepare_params(...)."""
    w1t, w2t, b1, b2 = prepared
    n, c = x.shape
    c_pad = w1t.shape[0]
    out_dtype = x.dtype
    x_bytes = x.dtype.itemsize
    out_bytes = jnp.dtype(out_dtype).itemsize

    # ---- Per-generation VMEM budget ---------------------------------------
    cap = _vmem_capacity_bytes()                 # 128 MiB v5e/v6e, 64 MiB v7x
    vmem_limit = min(100 * _MIB, cap * 7 // 8)   # ~100 MiB v5e/v6e, ~56 MiB v7x
    budget = vmem_limit - 4 * _MIB

    # Resident bytes: two bf16 weight matrices and two f32 shift rows, each
    # double-buffered by the pipeline even with a constant index_map.
    resident = 2 * (2 * c_pad * c_pad * 2) + 2 * (2 * c_pad * 4)
    # Per-row bytes: double-buffered x and out tiles plus in-kernel temporaries
    # (f32 residual copy, bf16 x, f32 h, bf16 h, f32 o ~= 16 B/elem).
    per_row = c_pad * (2 * x_bytes + 2 * out_bytes + 16)
    fit_rows = (budget - resident) // per_row
    if fit_rows < 8:
        # Weights alone (nearly) exhaust the budget; see TODO(synk) above about
        # the K-tiled / single-buffered-weights variant for very large C.
        fit_rows = 8

    # ---- Row tiling: biggest tile that fits; >= 2 (even count) grid steps
    # whenever possible so ("parallel",) can use both v7x TensorCores. --------
    n8 = _round_up(n, 8)
    tile_cap = max(8, min(max_tile_n, fit_rows) // 8 * 8)
    num_tiles = pl.cdiv(n8, tile_cap)
    if n8 >= 16:
        num_tiles = max(num_tiles, 2)
        if num_tiles % 2:
            num_tiles += 1
    tile_n = _round_up(pl.cdiv(n8, num_tiles), 8)
    n_pad = tile_n * num_tiles

    # ---- Fast path: no pad / no output slice when already aligned ----------
    needs_pad = (n_pad != n) or (c_pad != c)
    xp = jnp.pad(x, ((0, n_pad - n), (0, c_pad - c))) if needs_pad else x

    grid = (num_tiles,)
    row_spec = pl.BlockSpec((tile_n, c_pad), lambda i: (i, 0))

    def res_spec(shape):                          # VMEM-resident operands
        return pl.BlockSpec(shape, lambda i: (0, 0))

    flops = 2 * 2 * n_pad * c_pad * c_pad
    bytes_accessed = (n_pad * c_pad * (x_bytes + out_bytes)   # x in + out
                      + 2 * c_pad * c_pad * 2                 # bf16 weights
                      + 2 * c_pad * 4)                        # shifts

    out = pl.pallas_call(
        _bottleneck_kernel,
        out_shape=jax.ShapeDtypeStruct((n_pad, c_pad), out_dtype),
        grid=grid,
        in_specs=[
            row_spec,                       # x tile (streamed)
            res_spec((c_pad, c_pad)),       # w1t (resident)
            res_spec((c_pad, c_pad)),       # w2t (resident)
            res_spec((1, c_pad)),           # b1
            res_spec((1, c_pad)),           # b2
        ],
        out_specs=row_spec,
        compiler_params=pltpu.CompilerParams(
            dimension_semantics=("parallel",),
            vmem_limit_bytes=int(vmem_limit),
        ),
        cost_estimate=pl.CostEstimate(
            flops=int(flops), transcendentals=0,
            bytes_accessed=int(bytes_accessed)),
    )(xp, w1t, w2t, b1, b2)

    if needs_pad:
        out = out[:n, :c]
    return out


# ----------------------------------------------------------------------------
# Pure-JAX reference (f32 end to end) and test harness
# ----------------------------------------------------------------------------
def _reference(x, w1, w2, bn1_params, bn2_params):
    s1, b1 = fold_bn(*bn1_params)
    s2, b2 = fold_bn(*bn2_params)
    h = jnp.maximum(x @ w1.T * s1 + b1, 0.0)
    o = (h @ w2.T) * s2 + b2 + x
    return jnp.maximum(o, 0.0)


def _init_params(key, c, zero_init=True):
    k1, k2, k3, k4 = jax.random.split(key, 4)
    # Conv2d(C, C, 1) weight (C_out, C_in, 1, 1) collapsed to (C_out, C_in).
    w1 = jax.random.normal(k1, (c, c), jnp.float32) * 0.1
    w2 = jax.random.normal(k2, (c, c), jnp.float32) * 0.1
    bn1 = (jnp.ones((c,)) + 0.05 * jax.random.normal(k3, (c,)),
           0.05 * jax.random.normal(k4, (c,)),
           jnp.zeros((c,)), jnp.ones((c,)))
    bn2_gamma = jnp.zeros((c,)) if zero_init else jnp.ones((c,))
    bn2 = (bn2_gamma, jnp.zeros((c,)), jnp.zeros((c,)), jnp.ones((c,)))
    return w1, w2, bn1, bn2


if __name__ == "__main__":
    key = jax.random.PRNGKey(0)
    kx, kp = jax.random.split(key)

    ok = True
    # f32: small module-default-like shape; a shape exercising row tiling and
    # channel padding; an aligned shape that hits the no-pad fast path.
    for (N, C) in ((8, 32), (384, 96), (512, 128)):
        x = jax.random.normal(kx, (N, C), jnp.float32)
        for zero_init in (True, False):       # True is the module default
            w1, w2, bn1, bn2 = _init_params(kp, C, zero_init=zero_init)
            prepared = prepare_params(w1, w2, bn1, bn2)
            out = jax.block_until_ready(bottleneck_linear(x, prepared))
            ref = _reference(x, w1, w2, bn1, bn2)
            # MXU operands are bf16 (f32 accumulation); epilogue/residual f32.
            ok &= bool(jnp.allclose(out, ref, atol=5e-2, rtol=5e-2))

    # bf16 activation streaming path (recommended in the mem-bound regime).
    xb = jax.random.normal(kx, (512, 128), jnp.float32).astype(jnp.bfloat16)
    w1, w2, bn1, bn2 = _init_params(kp, 128, zero_init=False)
    prepared = prepare_params(w1, w2, bn1, bn2)
    outb = jax.block_until_ready(bottleneck_linear(xb, prepared))
    refb = _reference(xb.astype(jnp.float32), w1, w2, bn1, bn2)
    ok &= bool(jnp.allclose(outb.astype(jnp.float32), refb,
                            atol=1.5e-1, rtol=1.5e-1))

    print("KERNEL_OK" if ok else "KERNEL_MISMATCH")
</pallas_src>

<mosaic_0001>
module attributes {stable_mosaic.version = 11 : i64} {
  func.func @_bottleneck_kernel(%arg0: i32, %arg1: memref<8x128xf32, #tpu.memory_space<vmem>>, %arg2: memref<128x128xbf16, #tpu.memory_space<vmem>>, %arg3: memref<128x128xbf16, #tpu.memory_space<vmem>>, %arg4: memref<1x128xf32, #tpu.memory_space<vmem>>, %arg5: memref<1x128xf32, #tpu.memory_space<vmem>>, %arg6: memref<8x128xf32, #tpu.memory_space<vmem>>) attributes {dimension_semantics = [#tpu.dimension_semantics<parallel>], iteration_bounds = array<i64: 1>, scalar_prefetch = 0 : i64, scratch_operands = 0 : i64, tpu.core_type = #tpu.core_type<tc>, window_params = [{transform_indices = @transform_0, window_bounds = array<i64: 8, 128>}, {pipeline_mode = #tpu.pipeline_mode<synchronous>, transform_indices = @transform_1, window_bounds = array<i64: 128, 128>}, {pipeline_mode = #tpu.pipeline_mode<synchronous>, transform_indices = @transform_2, window_bounds = array<i64: 128, 128>}, {pipeline_mode = #tpu.pipeline_mode<synchronous>, transform_indices = @transform_3, window_bounds = array<i64: 1, 128>}, {pipeline_mode = #tpu.pipeline_mode<synchronous>, transform_indices = @transform_4, window_bounds = array<i64: 1, 128>}, {transform_indices = @transform_5, window_bounds = array<i64: 8, 128>}]} {
    %c0 = arith.constant 0 : index
    %c0_0 = arith.constant 0 : index
    %0 = vector.load %arg1[%c0, %c0_0] : memref<8x128xf32, #tpu.memory_space<vmem>>, vector<8x128xf32>
    %1 = arith.truncf %0 : vector<8x128xf32> to vector<8x128xbf16>
    %c0_1 = arith.constant 0 : index
    %c0_2 = arith.constant 0 : index
    %2 = vector.load %arg2[%c0_1, %c0_2] : memref<128x128xbf16, #tpu.memory_space<vmem>>, vector<128x128xbf16>
    %cst = arith.constant dense<0.000000e+00> : vector<8x128xf32>
    %3 = tpu.matmul %1, %2, %cst {dimension_numbers = #tpu.dot_dimension_numbers<[1], [0], [0], [1], [0, 0, 1, 1], [], []>} : vector<8x128xbf16>, vector<128x128xbf16>, vector<8x128xf32> -> vector<8x128xf32>
    %c0_3 = arith.constant 0 : index
    %c0_4 = arith.constant 0 : index
    %4 = vector.load %arg4[%c0_3, %c0_4] : memref<1x128xf32, #tpu.memory_space<vmem>>, vector<1x128xf32>
    %5 = vector.broadcast %4 : vector<1x128xf32> to vector<8x128xf32>
    %6 = arith.addf %3, %5 : vector<8x128xf32>
    %cst_5 = arith.constant 0.000000e+00 : f32
    %7 = vector.broadcast %cst_5 : f32 to vector<8x128xf32>
    %8 = arith.maximumf %6, %7 : vector<8x128xf32>
    %9 = arith.truncf %8 : vector<8x128xf32> to vector<8x128xbf16>
    %c0_6 = arith.constant 0 : index
    %c0_7 = arith.constant 0 : index
    %10 = vector.load %arg3[%c0_6, %c0_7] : memref<128x128xbf16, #tpu.memory_space<vmem>>, vector<128x128xbf16>
    %cst_8 = arith.constant dense<0.000000e+00> : vector<8x128xf32>
    %11 = tpu.matmul %9, %10, %cst_8 {dimension_numbers = #tpu.dot_dimension_numbers<[1], [0], [0], [1], [0, 0, 1, 1], [], []>} : vector<8x128xbf16>, vector<128x128xbf16>, vector<8x128xf32> -> vector<8x128xf32>
    %c0_9 = arith.constant 0 : index
    %c0_10 = arith.constant 0 : index
    %12 = vector.load %arg5[%c0_9, %c0_10] : memref<1x128xf32, #tpu.memory_space<vmem>>, vector<1x128xf32>
    %13 = vector.broadcast %12 : vector<1x128xf32> to vector<8x128xf32>
    %14 = arith.addf %11, %13 : vector<8x128xf32>
    %15 = arith.addf %14, %0 : vector<8x128xf32>
    %cst_11 = arith.constant 0.000000e+00 : f32
    %16 = vector.broadcast %cst_11 : f32 to vector<8x128xf32>
    %17 = arith.maximumf %15, %16 : vector<8x128xf32>
    %c0_12 = arith.constant 0 : index
    %c0_13 = arith.constant 0 : index
    %18 = vector.load %arg6[%c0_12, %c0_13] : memref<8x128xf32, #tpu.memory_space<vmem>>, vector<8x128xf32>
    tpu.vector_store %arg6[%c0_12, %c0_13], %17 {strides = array<i32>} : memref<8x128xf32, #tpu.memory_space<vmem>>, vector<8x128xf32>,
    return
  }
  func.func @transform_0(%arg0: i32) -> (i32, i32) {
    %c0_i32 = arith.constant 0 : i32
    %c0_i32_0 = arith.constant 0 : i32
    return %arg0, %c0_i32 : i32, i32
  }
  func.func @transform_1(%arg0: i32) -> (i32, i32) {
    %c0_i32 = arith.constant 0 : i32
    %c0_i32_0 = arith.constant 0 : i32
    %c0_i32_1 = arith.constant 0 : i32
    return %c0_i32, %c0_i32_0 : i32, i32
  }
  func.func @transform_2(%arg0: i32) -> (i32, i32) {
    %c0_i32 = arith.constant 0 : i32
    %c0_i32_0 = arith.constant 0 : i32
    %c0_i32_1 = arith.constant 0 : i32
    return %c0_i32, %c0_i32_0 : i32, i32
  }
  func.func @transform_3(%arg0: i32) -> (i32, i32) {
    %c0_i32 = arith.constant 0 : i32
    %c0_i32_0 = arith.constant 0 : i32
    %c0_i32_1 = arith.constant 0 : i32
    return %c0_i32, %c0_i32_0 : i32, i32
  }
  func.func @transform_4(%arg0: i32) -> (i32, i32) {
    %c0_i32 = arith.constant 0 : i32
    %c0_i32_0 = arith.constant 0 : i32
    %c0_i32_1 = arith.constant 0 : i32
    return %c0_i32, %c0_i32_0 : i32, i32
  }
  func.func @transform_5(%arg0: i32) -> (i32, i32) {
    %c0_i32 = arith.constant 0 : i32
    %c0_i32_0 = arith.constant 0 : i32
    return %arg0, %c0_i32 : i32, i32
  }
}

</mosaic_0001>

<llo_original>
// kernel: tpu_custom_call.1
$region0: #{tpu_custom_call.1}
  #allocation0 [shape = 'u32[]', space=smem, size = 0x4, offset = 0x4, fixed_abs, tag = 'smem constant byte address 0x4 - core index']
  #allocation1 [shape = 'u32[144,128]{1,0:T(1,128)}', space=vmem, size = 0x12000, scoped, tag = 'internal scratch']
  %s0 = inlined_call_operand.hbm [shape: f32[8,128], index: 0, kind: input, shape index: {}]
  %s1 = inlined_call_operand.hbm [shape: bf16[128,128], index: 1, kind: input, shape index: {}]
  %s2 = inlined_call_operand.hbm [shape: bf16[128,128], index: 2, kind: input, shape index: {}]
  %s3 = inlined_call_operand.vmem [shape: f32[1,128], index: 3, kind: input, shape index: {}]
  %s4 = inlined_call_operand.vmem [shape: f32[1,128], index: 4, kind: input, shape index: {}]
  %s5 = inlined_call_operand.hbm [shape: f32[8,128], index: 5, kind: output, shape index: {}]
  %s6 = sld [smem:[#allocation0]]
  $region42: #{tpu_custom_call.1} parent=0
    _
  %s8 = ssub.s32 1, %s6
  %s9 = scalar_select 0, %s8, %s6
  $region1: #{tpu_custom_call.1} parent=0
    #allocation2 [shape = 'u8[4096]{0}', space=vmem, size = 0x1000, scoped, tag = 'input window, operand 0, single buffered']
    #allocation3 [shape = 's32[1]{0}', space=sflag, size = 0x4, scoped, tag = 'scoped memory for tpu_custom_call.1']
    #allocation4 [shape = 's32[1]{0}', space=sflag, size = 0x4, scoped, tag = 'scoped memory for tpu_custom_call.1']
    #allocation5 [shape = 'u8[32768]{0}', space=vmem, size = 0x8000, scoped, tag = 'input window, operand 1, single buffered']
    #allocation6 [shape = 's32[1]{0}', space=sflag, size = 0x4, scoped, tag = 'scoped memory for tpu_custom_call.1']
    #allocation7 [shape = 'u8[32768]{0}', space=vmem, size = 0x8000, scoped, tag = 'input window, operand 2, single buffered']
    #allocation8 [shape = 'u8[4096]{0}', space=vmem, size = 0x1000, scoped, tag = 'output window, operand 0, single buffered']
    %10 = vsyncpa [#allocation3], 0
    %11 = vsyncpa [#allocation6], 0
    %12 = vsyncpa [#allocation4], 0
    // Predicated region
    $region2: #{tpu_custom_call.1} parent=1 // pred_check
      _
    $region3: #{tpu_custom_call.1} parent=1 // pred_check_branch
      %14 = sbr.rel (0) target = $region5
    $region4: #{tpu_custom_call.1} parent=1 // pred_region
      %s16 = ssub.s32 128, 128
      %17 = vsyncadd [#allocation3], %s16
      %s19 = sshll.u32 [#allocation2], 4
      %s20 = int_to_ptr.vmem [resolvable:$true] %s19
      %22 = dma.hbm_to_vmem [thread:$0]  %s0, 128, %s20, [#allocation3]
    $region5: #{tpu_custom_call.1} parent=1 // pred_fallthru
      _
    // Predicated region
    $region6: #{tpu_custom_call.1} parent=1 // pred_check
      _
    $region7: #{tpu_custom_call.1} parent=1 // pred_check_branch
      %24 = sbr.rel (0) target = $region9
    $region8: #{tpu_custom_call.1} parent=1 // pred_region
      %s26 = ssub.s32 1024, 1024
      %27 = vsyncadd [#allocation6], %s26
      %s28 = sshll.u32 [#allocation5], 4
      %s29 = int_to_ptr.vmem [resolvable:$true] %s28
      %34 = dma.hbm_to_vmem [thread:$0]  %s1, 1024, %s29, [#allocation6], 64, 64, 4
    $region9: #{tpu_custom_call.1} parent=1 // pred_fallthru
      _
    // Predicated region
    $region10: #{tpu_custom_call.1} parent=1 // pred_check
      _
    $region11: #{tpu_custom_call.1} parent=1 // pred_check_branch
      %36 = sbr.rel (0) target = $region13
    $region12: #{tpu_custom_call.1} parent=1 // pred_region
      %s38 = ssub.s32 1024, 1024
      %39 = vsyncadd [#allocation6], %s38
      %s40 = sshll.u32 [#allocation7], 4
      %s41 = int_to_ptr.vmem [resolvable:$true] %s40
      %46 = dma.hbm_to_vmem [thread:$0]  %s2, 1024, %s41, [#allocation6], 64, 64, 4
    $region13: #{tpu_custom_call.1} parent=1 // pred_fallthru
      _
    // Predicated region
    $region14: #{tpu_custom_call.1} parent=1 // pred_check
      _
    $region15: #{tpu_custom_call.1} parent=1 // pred_check_branch
      %48 = sbr.rel (0) target = $region17
    $region16: #{tpu_custom_call.1} parent=1 // pred_region
      _
    $region17: #{tpu_custom_call.1} parent=1 // pred_fallthru
      _
    // Predicated region
    $region18: #{tpu_custom_call.1} parent=1 // pred_check
      _
    $region19: #{tpu_custom_call.1} parent=1 // pred_check_branch
      %50 = sbr.rel (0) target = $region21
    $region20: #{tpu_custom_call.1} parent=1 // pred_region
      _
    $region21: #{tpu_custom_call.1} parent=1 // pred_fallthru
      _
    // Predicated region
    $region22: #{tpu_custom_call.1} parent=1 // pred_check
      _
    $region23: #{tpu_custom_call.1} parent=1 // pred_check_branch
      %52 = sbr.rel (0) target = $region25
    $region24: #{tpu_custom_call.1} parent=1 // pred_region
      %53 = dma.done [#allocation3], 128
    $region25: #{tpu_custom_call.1} parent=1 // pred_fallthru
      _
    // Predicated region
    $region26: #{tpu_custom_call.1} parent=1 // pred_check
      _
    $region27: #{tpu_custom_call.1} parent=1 // pred_check_branch
      %55 = sbr.rel (0) target = $region29
    $region28: #{tpu_custom_call.1} parent=1 // pred_region
      %56 = dma.done [#allocation6], 1024
    $region29: #{tpu_custom_call.1} parent=1 // pred_fallthru
      _
    // Predicated region
    $region30: #{tpu_custom_call.1} parent=1 // pred_check
      _
    $region31: #{tpu_custom_call.1} parent=1 // pred_check_branch
      %58 = sbr.rel (0) target = $region33
    $region32: #{tpu_custom_call.1} parent=1 // pred_region
      %59 = dma.done [#allocation6], 1024
    $region33: #{tpu_custom_call.1} parent=1 // pred_fallthru
      _
    %v61 = vld [vmem:[#allocation2] sm:$0xff]
    %v62 = vpack.c.bf16 %v61, %v61
    %v63 = vld [vmem:[#allocation5] sm:$0xf]
    %v64 = vld [vmem:[#allocation5 + $0x4] sm:$0xf]
    %v65 = vld [vmem:[#allocation5 + $0x8] sm:$0xf]
    %v66 = vld [vmem:[#allocation5 + $0xc] sm:$0xf]
    %v67 = vld [vmem:[#allocation5 + $0x10] sm:$0xf]
    %v68 = vld [vmem:[#allocation5 + $0x14] sm:$0xf]
    %v69 = vld [vmem:[#allocation5 + $0x18] sm:$0xf]
    %v70 = vld [vmem:[#allocation5 + $0x1c] sm:$0xf]
    %v71 = vld [vmem:[#allocation5 + $0x20] sm:$0xf]
    %v72 = vld [vmem:[#allocation5 + $0x24] sm:$0xf]
    %v73 = vld [vmem:[#allocation5 + $0x28] sm:$0xf]
    %v74 = vld [vmem:[#allocation5 + $0x2c] sm:$0xf]
    %v75 = vld [vmem:[#allocation5 + $0x30] sm:$0xf]
    %v76 = vld [vmem:[#allocation5 + $0x34] sm:$0xf]
    %v77 = vld [vmem:[#allocation5 + $0x38] sm:$0xf]
    %v78 = vld [vmem:[#allocation5 + $0x3c] sm:$0xf]
    %v79 = vld [vmem:[%s3] sm:$0x1]
    %v81 = vlaneseq
    %v82 = vshrl.u32 %v81, 7
    %v83 = vsub.s32 0, %v82
    %v84 = vrot.slane %v79, %v83
    %v102 = vunpack.c.l.b16 %v63
    %v103 = vunpack.c.l.b16 %v64
    %v104 = vunpack.c.l.b16 %v65
    %v105 = vunpack.c.l.b16 %v66
    %v106 = vunpack.c.l.b16 %v67
    %v107 = vunpack.c.l.b16 %v68
    %v108 = vunpack.c.l.b16 %v69
    %v109 = vunpack.c.l.b16 %v70
    %v110 = vunpack.c.l.b16 %v71
    %v111 = vunpack.c.l.b16 %v72
    %v112 = vunpack.c.l.b16 %v73
    %v113 = vunpack.c.l.b16 %v74
    %v114 = vunpack.c.l.b16 %v75
    %v115 = vunpack.c.l.b16 %v76
    %v116 = vunpack.c.l.b16 %v77
    %v117 = vunpack.c.l.b16 %v78
    %v118 = vpack.c.b16 %v103, %v102
    %v119 = vpack.c.b16 %v105, %v104
    %v120 = vpack.c.b16 %v107, %v106
    %v121 = vpack.c.b16 %v109, %v108
    %v122 = vpack.c.b16 %v111, %v110
    %v123 = vpack.c.b16 %v113, %v112
    %v124 = vpack.c.b16 %v115, %v114
    %v125 = vpack.c.b16 %v117, %v116
    %134 = vmatprep.subr.bf16.mxu0 0
    %135 = vmatpush1.bf16.msra.mxu0 %v118
    %136 = vmatprep.subr.bf16.mxu0 0
    %137 = vmatpush1.bf16.msra.mxu0 %v119
    %138 = vmatprep.subr.bf16.mxu0 0
    %139 = vmatpush1.bf16.msra.mxu0 %v120
    %140 = vmatprep.subr.bf16.mxu0 0
    %141 = vmatpush1.bf16.msra.mxu0 %v121
    %142 = vmatprep.subr.bf16.mxu0 0
    %143 = vmatpush1.bf16.msra.mxu0 %v122
    %144 = vmatprep.subr.bf16.mxu0 0
    %145 = vmatpush1.bf16.msra.mxu0 %v123
    %146 = vmatprep.subr.bf16.mxu0 0
    %147 = vmatpush1.bf16.msra.mxu0 %v124
    %148 = vmatprep.subr.bf16.mxu0 0
    %149 = vmatpush1.bf16.msra.mxu0 %v125
    %150 = vmatprep.subr.bf16.mxu0 0
    %151 = vmatpush1.bf16.msra.mxu0 0
    %152 = vmatprep.subr.bf16.mxu0 0
    %153 = vmatpush1.bf16.msra.mxu0 0
    %154 = vmatprep.subr.bf16.mxu0 0
    %155 = vmatpush1.bf16.msra.mxu0 0
    %156 = vmatprep.subr.bf16.mxu0 0
    %157 = vmatpush1.bf16.msra.mxu0 0
    %158 = vmatprep.subr.bf16.mxu0 0
    %159 = vmatpush1.bf16.msra.mxu0 0
    %160 = vmatprep.subr.bf16.mxu0 0
    %161 = vmatpush1.bf16.msra.mxu0 0
    %162 = vmatprep.subr.bf16.mxu0 0
    %163 = vmatpush1.bf16.msra.mxu0 0
    %164 = vmatprep.subr.bf16.mxu0 0
    %165 = vmatpush1.bf16.msra.mxu0 0
    %166 = vmatprep.mubr.bf16.mxu0 0
    %167 = vmatmul.mubr.bf16.gmra.mrb[0].mxu0 %v62
    %v168 = vpop.f32.mrb[0].mxu0
    %v169 = vadd.f32 %v84, %v168
    %v170 = vpop.f32.mrb[0].mxu0
    %v171 = vpop.f32.mrb[0].mxu0
    %v172 = vpop.f32.mrb[0].mxu0
    %173 = vdwg.mxu0
    %v174 = vmax.f32 %v169, 0.0
    %v175 = vpack.c.bf16 %v174, %v174
    %v176 = vld [vmem:[#allocation7] sm:$0xf]
    %v177 = vld [vmem:[#allocation7 + $0x4] sm:$0xf]
    %v178 = vld [vmem:[#allocation7 + $0x8] sm:$0xf]
    %v179 = vld [vmem:[#allocation7 + $0xc] sm:$0xf]
    %v180 = vld [vmem:[#allocation7 + $0x10] sm:$0xf]
    %v181 = vld [vmem:[#allocation7 + $0x14] sm:$0xf]
    %v182 = vld [vmem:[#allocation7 + $0x18] sm:$0xf]
    %v183 = vld [vmem:[#allocation7 + $0x1c] sm:$0xf]
    %v184 = vld [vmem:[#allocation7 + $0x20] sm:$0xf]
    %v185 = vld [vmem:[#allocation7 + $0x24] sm:$0xf]
    %v186 = vld [vmem:[#allocation7 + $0x28] sm:$0xf]
    %v187 = vld [vmem:[#allocation7 + $0x2c] sm:$0xf]
    %v188 = vld [vmem:[#allocation7 + $0x30] sm:$0xf]
    %v189 = vld [vmem:[#allocation7 + $0x34] sm:$0xf]
    %v190 = vld [vmem:[#allocation7 + $0x38] sm:$0xf]
    %v191 = vld [vmem:[#allocation7 + $0x3c] sm:$0xf]
    %v192 = vld [vmem:[%s4] sm:$0x1]
    %v194 = vlaneseq
    %v195 = vshrl.u32 %v194, 7
    %v196 = vsub.s32 0, %v195
    %v197 = vrot.slane %v192, %v196
    %v215 = vunpack.c.l.b16 %v176
    %v216 = vunpack.c.l.b16 %v177
    %v217 = vunpack.c.l.b16 %v178
    %v218 = vunpack.c.l.b16 %v179
    %v219 = vunpack.c.l.b16 %v180
    %v220 = vunpack.c.l.b16 %v181
    %v221 = vunpack.c.l.b16 %v182
    %v222 = vunpack.c.l.b16 %v183
    %v223 = vunpack.c.l.b16 %v184
    %v224 = vunpack.c.l.b16 %v185
    %v225 = vunpack.c.l.b16 %v186
    %v226 = vunpack.c.l.b16 %v187
    %v227 = vunpack.c.l.b16 %v188
    %v228 = vunpack.c.l.b16 %v189
    %v229 = vunpack.c.l.b16 %v190
    %v230 = vunpack.c.l.b16 %v191
    %v231 = vpack.c.b16 %v216, %v215
    %v232 = vpack.c.b16 %v218, %v217
    %v233 = vpack.c.b16 %v220, %v219
    %v234 = vpack.c.b16 %v222, %v221
    %v235 = vpack.c.b16 %v224, %v223
    %v236 = vpack.c.b16 %v226, %v225
    %v237 = vpack.c.b16 %v228, %v227
    %v238 = vpack.c.b16 %v230, %v229
    %247 = vmatprep.subr.bf16.mxu0 0
    %248 = vmatpush1.bf16.msra.mxu0 %v231
    %249 = vmatprep.subr.bf16.mxu0 0
    %250 = vmatpush1.bf16.msra.mxu0 %v232
    %251 = vmatprep.subr.bf16.mxu0 0
    %252 = vmatpush1.bf16.msra.mxu0 %v233
    %253 = vmatprep.subr.bf16.mxu0 0
    %254 = vmatpush1.bf16.msra.mxu0 %v234
    %255 = vmatprep.subr.bf16.mxu0 0
    %256 = vmatpush1.bf16.msra.mxu0 %v235
    %257 = vmatprep.subr.bf16.mxu0 0
    %258 = vmatpush1.bf16.msra.mxu0 %v236
    %259 = vmatprep.subr.bf16.mxu0 0
    %260 = vmatpush1.bf16.msra.mxu0 %v237
    %261 = vmatprep.subr.bf16.mxu0 0
    %262 = vmatpush1.bf16.msra.mxu0 %v238
    %263 = vmatprep.subr.bf16.mxu0 0
    %264 = vmatpush1.bf16.msra.mxu0 0
    %265 = vmatprep.subr.bf16.mxu0 0
    %266 = vmatpush1.bf16.msra.mxu0 0
    %267 = vmatprep.subr.bf16.mxu0 0
    %268 = vmatpush1.bf16.msra.mxu0 0
    %269 = vmatprep.subr.bf16.mxu0 0
    %270 = vmatpush1.bf16.msra.mxu0 0
    %271 = vmatprep.subr.bf16.mxu0 0
    %272 = vmatpush1.bf16.msra.mxu0 0
    %273 = vmatprep.subr.bf16.mxu0 0
    %274 = vmatpush1.bf16.msra.mxu0 0
    %275 = vmatprep.subr.bf16.mxu0 0
    %276 = vmatpush1.bf16.msra.mxu0 0
    %277 = vmatprep.subr.bf16.mxu0 0
    %278 = vmatpush1.bf16.msra.mxu0 0
    %279 = vmatprep.mubr.bf16.mxu0 0
    %280 = vmatmul.mubr.bf16.gmra.mrb[0].mxu0 %v175
    %v281 = vpop.f32.mrb[0].mxu0
    %v282 = vadd.f32 %v197, %v281
    %v283 = vpop.f32.mrb[0].mxu0
    %v284 = vpop.f32.mrb[0].mxu0
    %v285 = vpop.f32.mrb[0].mxu0
    %286 = vdwg.mxu0
    %v287 = vadd.f32 %v282, %v61
    %v288 = vmax.f32 %v287, 0.0
    %289 = vst [vmem:[#allocation8] sm:$0xff] %v288
    // Predicated region
    $region34: #{tpu_custom_call.1} parent=1 // pred_check
      _
    $region35: #{tpu_custom_call.1} parent=1 // pred_check_branch
      %291 = sbr.rel (0) target = $region37
    $region36: #{tpu_custom_call.1} parent=1 // pred_region
      %s293 = ssub.s32 128, 128
      %294 = vsyncadd [#allocation4], %s293
      %s296 = sshll.u32 [#allocation8], 4
      %s297 = int_to_ptr.vmem [resolvable:$true] %s296
      %299 = dma.vmem_to_hbm [thread:$0]  %s297, 128, %s5, [#allocation4]
    $region37: #{tpu_custom_call.1} parent=1 // pred_fallthru
      _
    // Predicated region
    $region38: #{tpu_custom_call.1} parent=1 // pred_check
      _
    $region39: #{tpu_custom_call.1} parent=1 // pred_check_branch
      %301 = sbr.rel (0) target = $region41
    $region40: #{tpu_custom_call.1} parent=1 // pred_region
      %302 = dma.done [#allocation4], 128
    $region41: #{tpu_custom_call.1} parent=1 // pred_fallthru
      _
    %303 = vsyncpa [#allocation3], 1
    %304 = vsyncpa [#allocation6], 1
    %305 = vsyncpa [#allocation4], 1

</llo_original>
